<compile_context>
chip_gen: v7x
topology: tpu7x:2x2x1
jax: 0.10.0
libtpu: 0.0.40
codegen_flags: <defaults>
</compile_context>

<pallas_src>
import jax
import jax.numpy as jnp
from jax.experimental import pallas as pl
from jax.experimental.pallas import tpu as pltpu


# ~2 MiB per input block: (in + out) x 2 pipeline buffers ~ 8 MiB -> fits every
# generation's scoped-VMEM default (16 MiB v5e, 32 MiB v6e/v7x) with headroom.
# TODO(synk): could be made generation-aware (6-8 MiB on v7x) via pltpu.get_tpu_info().
_TARGET_TILE_BYTES = 2 * 1024 * 1024
# Largest 128-aligned feature tile such that an 8-row f32 block stays within the target.
_MAX_TILE_F = (_TARGET_TILE_BYTES // (8 * 4) // 128) * 128  # 65536 elements


def _affine_kernel(x_ref, mean_ref, inv_ref, o_ref):
    # Hot path: one subtract + one multiply per element; (1, tile_f) stats broadcast
    # across the sublane (batch) dim inside the kernel.
    x = x_ref[...].astype(jnp.float32)
    o_ref[...] = ((x - mean_ref[...]) * inv_ref[...]).astype(o_ref.dtype)


def _pick_tiles(B, F, itemsize, allow_split):
    """Choose (tile_b, tile_f) obeying the (8, 128) block-alignment rules."""
    # Feature tile: multiple of 128, or the full row when that is small/ragged.
    if F % 128 == 0:
        tile_f = min(F, _MAX_TILE_F)
    elif F > _MAX_TILE_F:
        tile_f = _MAX_TILE_F          # ragged tail -> masked stores on the last block only
    else:
        tile_f = F                    # full-extent block (always legal)

    # Batch tile: multiple of 8, or the full batch.
    rows = max(1, _TARGET_TILE_BYTES // max(1, tile_f * itemsize))
    if rows >= B:
        tile_b = B
    elif rows >= 8:
        tile_b = (rows // 8) * 8
    else:
        tile_b = min(8, B)

    grid_b = pl.cdiv(B, tile_b)
    grid_f = pl.cdiv(F, tile_f)

    # Megacore (v7x): make sure large-enough single-block cases still yield >= 2 steps.
    if allow_split and grid_b == 1 and grid_f == 1 and B >= 16:
        half = ((pl.cdiv(B, 2) + 7) // 8) * 8
        tile_b = min(B, half)
        grid_b = pl.cdiv(B, tile_b)

    return tile_b, tile_f, grid_b, grid_f


def _normalize_2d(x2d, mean_row, inv_row, *, alias_input=False, allow_split=False):
    """x2d: (B, F); mean_row / inv_row: (1, F) float32 rows. Returns normalized (B, F)."""
    B, F = x2d.shape
    tile_b, tile_f, grid_b, grid_f = _pick_tiles(B, F, x2d.dtype.itemsize, allow_split)

    extra = {}
    if alias_input:
        # In-place in HBM when the caller donates; otherwise XLA inserts a copy.
        extra["input_output_aliases"] = {0: 0}

    return pl.pallas_call(
        _affine_kernel,
        out_shape=jax.ShapeDtypeStruct((B, F), x2d.dtype),
        grid_spec=pltpu.PrefetchScalarGridSpec(
            num_scalar_prefetch=0,
            grid=(grid_b, grid_f),
            in_specs=[
                pl.BlockSpec((tile_b, tile_f), lambda i, j: (i, j)),
                pl.BlockSpec((1, tile_f), lambda i, j: (0, j)),  # stats resident per column tile
                pl.BlockSpec((1, tile_f), lambda i, j: (0, j)),
            ],
            out_specs=pl.BlockSpec((tile_b, tile_f), lambda i, j: (i, j)),
        ),
        compiler_params=pltpu.CompilerParams(
            dimension_semantics=("parallel", "parallel"),
        ),
        **extra,
    )(x2d, mean_row, inv_row)


def _per_lead_row(stat, C, L):
    """Expand a per-lead stat (scalar, (C,), or (C,1)) to a (1, C*L) float32 row."""
    s = jnp.asarray(stat, jnp.float32).reshape(-1)
    if s.size == 1:
        s = jnp.broadcast_to(s, (C,))
    return jnp.broadcast_to(s.reshape(C, 1), (C, L)).reshape(1, C * L)


def _normalize_ecg(x, mean_c, std_c):
    """x: (B, C, L); per-lead mean/std. Lane-dense 2-D slab, tiled + pipelined."""
    B, C, L = x.shape
    x2 = x.reshape(B, C * L)                       # contiguous: free reshape
    mean_row = _per_lead_row(mean_c, C, L)
    inv_row = _per_lead_row(1.0 / jnp.asarray(std_c, jnp.float32), C, L)
    out2 = _normalize_2d(x2, mean_row, inv_row, alias_input=True, allow_split=True)
    return out2.reshape(B, C, L)


def _normalize_features(x2d, mean_f, std_f):
    """x2d: (B, F) with per-feature stats (F,). Single unpadded launch."""
    F = x2d.shape[1]
    mean_row = jnp.asarray(mean_f, jnp.float32).reshape(1, F)
    inv_row = (1.0 / jnp.asarray(std_f, jnp.float32)).reshape(1, F)
    return _normalize_2d(x2d, mean_row, inv_row)


class Normalize:
    """JAX/Pallas port of the PyTorch Normalize module (operates on a batched sample dict)."""

    def __init__(self, mean_ecg, std_ecg, mean_meta, std_meta, mean_pqrst, std_pqrst):
        self.mean_ecg = mean_ecg      # (C,) per-lead
        self.std_ecg = std_ecg        # (C,)
        self.mean_meta = mean_meta    # (M,) or None
        self.std_meta = std_meta
        self.mean_pqrst = mean_pqrst  # (P,) or None
        self.std_pqrst = std_pqrst

    def forward(self, sample):
        sample = dict(sample)  # shallow copy, mirrors the in-place dict mutation semantics

        sample["ecg_signals"] = _normalize_ecg(
            sample["ecg_signals"], self.mean_ecg, self.std_ecg
        )
        if self.mean_meta is not None:
            sample["metadata"] = _normalize_features(
                sample["metadata"], self.mean_meta, self.std_meta
            )
        if self.mean_pqrst is not None:
            sample["pqrst_features"] = _normalize_features(
                sample["pqrst_features"], self.mean_pqrst, self.std_pqrst
            )
        return sample

    __call__ = forward


if __name__ == "__main__":
    key = jax.random.PRNGKey(0)
    k_ecg, k_meta, k_pqrst, k_m1, k_m2, k_m3 = jax.random.split(key, 6)

    B, C, L = 2, 4, 128   # batch, ECG leads, time samples
    M, P = 8, 16          # metadata features, PQRST features

    sample = {
        "ecg_signals": jax.random.normal(k_ecg, (B, C, L), dtype=jnp.float32) * 2.0 + 0.5,
        "metadata": jax.random.normal(k_meta, (B, M), dtype=jnp.float32) * 3.0 - 1.0,
        "pqrst_features": jax.random.normal(k_pqrst, (B, P), dtype=jnp.float32) + 2.0,
    }

    # Deterministic synthetic normalization statistics (module __init__ args).
    mean_ecg = jax.random.normal(k_m1, (C,), dtype=jnp.float32) * 0.1
    std_ecg = jnp.abs(jax.random.normal(k_m2, (C,), dtype=jnp.float32)) + 0.5
    mean_meta = jnp.linspace(-1.0, 1.0, M, dtype=jnp.float32)
    std_meta = jnp.linspace(0.5, 2.0, M, dtype=jnp.float32)
    mean_pqrst = jax.random.normal(k_m3, (P,), dtype=jnp.float32) * 0.2
    std_pqrst = jnp.linspace(0.75, 1.5, P, dtype=jnp.float32)

    # Reference values computed BEFORE the kernel runs (ECG input may be aliased/donated).
    ref_ecg = (sample["ecg_signals"] - mean_ecg[None, :, None]) / std_ecg[None, :, None]
    ref_meta = (sample["metadata"] - mean_meta[None, :]) / std_meta[None, :]
    ref_pqrst = (sample["pqrst_features"] - mean_pqrst[None, :]) / std_pqrst[None, :]

    norm = Normalize(mean_ecg, std_ecg, mean_meta, std_meta, mean_pqrst, std_pqrst)
    out = norm(sample)
    out = jax.tree_util.tree_map(jax.block_until_ready, out)

    assert jnp.allclose(out["ecg_signals"], ref_ecg, atol=1e-5, rtol=1e-5)
    assert jnp.allclose(out["metadata"], ref_meta, atol=1e-5, rtol=1e-5)
    assert jnp.allclose(out["pqrst_features"], ref_pqrst, atol=1e-5, rtol=1e-5)

    print("KERNEL_OK")
</pallas_src>

<mosaic_0001>
module attributes {stable_mosaic.version = 11 : i64} {
  func.func @_affine_kernel(%arg0: i32, %arg1: i32, %arg2: memref<2x512xf32, #tpu.memory_space<vmem>>, %arg3: memref<1x512xf32, #tpu.memory_space<vmem>>, %arg4: memref<1x512xf32, #tpu.memory_space<vmem>>, %arg5: memref<2x512xf32, #tpu.memory_space<vmem>>) attributes {dimension_semantics = [#tpu.dimension_semantics<parallel>, #tpu.dimension_semantics<parallel>], iteration_bounds = array<i64: 1, 1>, scalar_prefetch = 0 : i64, scratch_operands = 0 : i64, tpu.core_type = #tpu.core_type<tc>, window_params = [{transform_indices = @transform_0, window_bounds = array<i64: 2, 512>}, {transform_indices = @transform_1, window_bounds = array<i64: 1, 512>}, {transform_indices = @transform_2, window_bounds = array<i64: 1, 512>}, {transform_indices = @transform_3, window_bounds = array<i64: 2, 512>}]} {
    %c0 = arith.constant 0 : index
    %c0_0 = arith.constant 0 : index
    %0 = vector.load %arg2[%c0, %c0_0] : memref<2x512xf32, #tpu.memory_space<vmem>>, vector<2x512xf32>
    %c0_1 = arith.constant 0 : index
    %c0_2 = arith.constant 0 : index
    %1 = vector.load %arg3[%c0_1, %c0_2] : memref<1x512xf32, #tpu.memory_space<vmem>>, vector<1x512xf32>
    %2 = vector.broadcast %1 : vector<1x512xf32> to vector<2x512xf32>
    %3 = arith.subf %0, %2 : vector<2x512xf32>
    %c0_3 = arith.constant 0 : index
    %c0_4 = arith.constant 0 : index
    %4 = vector.load %arg4[%c0_3, %c0_4] : memref<1x512xf32, #tpu.memory_space<vmem>>, vector<1x512xf32>
    %5 = vector.broadcast %4 : vector<1x512xf32> to vector<2x512xf32>
    %6 = arith.mulf %3, %5 : vector<2x512xf32>
    %c0_5 = arith.constant 0 : index
    %c0_6 = arith.constant 0 : index
    %7 = vector.load %arg5[%c0_5, %c0_6] : memref<2x512xf32, #tpu.memory_space<vmem>>, vector<2x512xf32>
    tpu.vector_store %arg5[%c0_5, %c0_6], %6 {strides = array<i32>} : memref<2x512xf32, #tpu.memory_space<vmem>>, vector<2x512xf32>,
    return
  }
  func.func @transform_0(%arg0: i32, %arg1: i32) -> (i32, i32) {
    %c0_i32 = arith.constant 0 : i32
    return %arg0, %arg1 : i32, i32
  }
  func.func @transform_1(%arg0: i32, %arg1: i32) -> (i32, i32) {
    %c0_i32 = arith.constant 0 : i32
    %c0_i32_0 = arith.constant 0 : i32
    return %c0_i32, %arg1 : i32, i32
  }
  func.func @transform_2(%arg0: i32, %arg1: i32) -> (i32, i32) {
    %c0_i32 = arith.constant 0 : i32
    %c0_i32_0 = arith.constant 0 : i32
    return %c0_i32, %arg1 : i32, i32
  }
  func.func @transform_3(%arg0: i32, %arg1: i32) -> (i32, i32) {
    %c0_i32 = arith.constant 0 : i32
    return %arg0, %arg1 : i32, i32
  }
}

</mosaic_0001>

<llo_original>
// kernel: tpu_custom_call.1
$region0: #{tpu_custom_call.1}
  #allocation0 [shape = 'u32[]', space=smem, size = 0x4, offset = 0x4, fixed_abs, tag = 'smem constant byte address 0x4 - core index']
  #allocation1 [shape = 'u32[144,128]{1,0:T(1,128)}', space=vmem, size = 0x12000, scoped, tag = 'internal scratch']
  %s0 = inlined_call_operand.hbm [shape: f32[2,512], index: 0, kind: input, shape index: {}, may-alias: {0,3}]
  %s1 = inlined_call_operand.vmem [shape: f32[1,512], index: 1, kind: input, shape index: {}]
  %s2 = inlined_call_operand.vmem [shape: f32[1,512], index: 2, kind: input, shape index: {}]
  %s3 = inlined_call_operand.hbm [shape: f32[2,512], index: 3, kind: output, shape index: {}, may-alias: {0,3}]
  %s4 = sld [smem:[#allocation0]]
  $region26: #{tpu_custom_call.1} parent=0
    _
  %s6 = ssub.s32 1, %s4
  %s7 = scalar_select 0, %s6, %s4
  $region1: #{tpu_custom_call.1} parent=0
    #allocation2 [shape = 'u8[4096]{0}', space=vmem, size = 0x1000, scoped, tag = 'input window, operand 0, single buffered']
    #allocation3 [shape = 's32[1]{0}', space=sflag, size = 0x4, scoped, tag = 'scoped memory for tpu_custom_call.1']
    #allocation4 [shape = 's32[1]{0}', space=sflag, size = 0x4, scoped, tag = 'scoped memory for tpu_custom_call.1']
    #allocation5 [shape = 'u8[4096]{0}', space=vmem, size = 0x1000, scoped, tag = 'output window, operand 0, single buffered']
    %8 = vsyncpa [#allocation3], 0
    %9 = vsyncpa [#allocation4], 0
    // Predicated region
    $region2: #{tpu_custom_call.1} parent=1 // pred_check
      _
    $region3: #{tpu_custom_call.1} parent=1 // pred_check_branch
      %11 = sbr.rel (0) target = $region5
    $region4: #{tpu_custom_call.1} parent=1 // pred_region
      %s13 = ssub.s32 128, 128
      %14 = vsyncadd [#allocation3], %s13
      %s16 = sshll.u32 [#allocation2], 4
      %s17 = int_to_ptr.vmem [resolvable:$true] %s16
      %19 = dma.hbm_to_vmem [thread:$0]  %s0, 128, %s17, [#allocation3]
    $region5: #{tpu_custom_call.1} parent=1 // pred_fallthru
      _
    // Predicated region
    $region6: #{tpu_custom_call.1} parent=1 // pred_check
      _
    $region7: #{tpu_custom_call.1} parent=1 // pred_check_branch
      %21 = sbr.rel (0) target = $region9
    $region8: #{tpu_custom_call.1} parent=1 // pred_region
      _
    $region9: #{tpu_custom_call.1} parent=1 // pred_fallthru
      _
    // Predicated region
    $region10: #{tpu_custom_call.1} parent=1 // pred_check
      _
    $region11: #{tpu_custom_call.1} parent=1 // pred_check_branch
      %23 = sbr.rel (0) target = $region13
    $region12: #{tpu_custom_call.1} parent=1 // pred_region
      _
    $region13: #{tpu_custom_call.1} parent=1 // pred_fallthru
      _
    // Predicated region
    $region14: #{tpu_custom_call.1} parent=1 // pred_check
      _
    $region15: #{tpu_custom_call.1} parent=1 // pred_check_branch
      %25 = sbr.rel (0) target = $region17
    $region16: #{tpu_custom_call.1} parent=1 // pred_region
      %26 = dma.done [#allocation3], 128
    $region17: #{tpu_custom_call.1} parent=1 // pred_fallthru
      _
    %v27 = vld [vmem:[#allocation2] sm:$0xff]
    %v28 = vld [vmem:[%s1] sm:$0xf]
    %v30 = vlaneseq
    %v31 = vshrl.u32 %v30, 7
    %v32 = vsub.s32 0, %v31
    %v33 = vrot.slane %v28, %v32
    %v34 = vlaneseq
    %v35 = vshrl.u32 %v34, 7
    %v36 = vsub.s32 1, %v35
    %v37 = vrot.slane %v28, %v36
    %v38 = vlaneseq
    %v39 = vshrl.u32 %v38, 7
    %v40 = vsub.s32 2, %v39
    %v41 = vrot.slane %v28, %v40
    %v42 = vlaneseq
    %v43 = vshrl.u32 %v42, 7
    %v44 = vsub.s32 3, %v43
    %v45 = vrot.slane %v28, %v44
    %v46 = vcombine.low %v33, %v37
    %v47 = vcombine.low %v41, %v45
    %v49 = vunpack.c.l.s4 1983009808
    %v50 = vunpack.c.0.s8 %v49
    %v51 = vlaneseq
    %v52 = vshrl.u32 %v51, 7
    %v53 = vsub.s32 %v50, %v52
    %v54 = vrot.slane %v46, %v53
    %v56 = vunpack.c.l.s4 1983009808
    %v57 = vunpack.c.0.s8 %v56
    %v58 = vlaneseq
    %v59 = vshrl.u32 %v58, 7
    %v60 = vsub.s32 %v57, %v59
    %v61 = vrot.slane %v47, %v60
    %v62 = vcombine.low %v54, %v61
    %v64 = vsub.f32 %v27, %v62
    %v65 = vld [vmem:[%s2] sm:$0xf]
    %v67 = vlaneseq
    %v68 = vshrl.u32 %v67, 7
    %v69 = vsub.s32 0, %v68
    %v70 = vrot.slane %v65, %v69
    %v71 = vlaneseq
    %v72 = vshrl.u32 %v71, 7
    %v73 = vsub.s32 1, %v72
    %v74 = vrot.slane %v65, %v73
    %v75 = vlaneseq
    %v76 = vshrl.u32 %v75, 7
    %v77 = vsub.s32 2, %v76
    %v78 = vrot.slane %v65, %v77
    %v79 = vlaneseq
    %v80 = vshrl.u32 %v79, 7
    %v81 = vsub.s32 3, %v80
    %v82 = vrot.slane %v65, %v81
    %v83 = vcombine.low %v70, %v74
    %v84 = vcombine.low %v78, %v82
    %v86 = vunpack.c.l.s4 1983009808
    %v87 = vunpack.c.0.s8 %v86
    %v88 = vlaneseq
    %v89 = vshrl.u32 %v88, 7
    %v90 = vsub.s32 %v87, %v89
    %v91 = vrot.slane %v83, %v90
    %v93 = vunpack.c.l.s4 1983009808
    %v94 = vunpack.c.0.s8 %v93
    %v95 = vlaneseq
    %v96 = vshrl.u32 %v95, 7
    %v97 = vsub.s32 %v94, %v96
    %v98 = vrot.slane %v84, %v97
    %v99 = vcombine.low %v91, %v98
    %v101 = vmul.f32 %v64, %v99
    %102 = vst [vmem:[#allocation5] sm:$0xff] %v101
    // Predicated region
    $region18: #{tpu_custom_call.1} parent=1 // pred_check
      _
    $region19: #{tpu_custom_call.1} parent=1 // pred_check_branch
      %104 = sbr.rel (0) target = $region21
    $region20: #{tpu_custom_call.1} parent=1 // pred_region
      %s106 = ssub.s32 128, 128
      %107 = vsyncadd [#allocation4], %s106
      %s109 = sshll.u32 [#allocation5], 4
      %s110 = int_to_ptr.vmem [resolvable:$true] %s109
      %112 = dma.vmem_to_hbm [thread:$0]  %s110, 128, %s3, [#allocation4]
    $region21: #{tpu_custom_call.1} parent=1 // pred_fallthru
      _
    // Predicated region
    $region22: #{tpu_custom_call.1} parent=1 // pred_check
      _
    $region23: #{tpu_custom_call.1} parent=1 // pred_check_branch
      %114 = sbr.rel (0) target = $region25
    $region24: #{tpu_custom_call.1} parent=1 // pred_region
      %115 = dma.done [#allocation4], 128
    $region25: #{tpu_custom_call.1} parent=1 // pred_fallthru
      _
    %116 = vsyncpa [#allocation3], 1
    %117 = vsyncpa [#allocation4], 1

</llo_original>
